<compile_context>
chip_gen: v7x
topology: tpu7x:2x2x1
jax: 0.10.0
libtpu: 0.0.40
codegen_flags: <defaults>
</compile_context>

<pallas_src>
import functools

import jax
import jax.numpy as jnp
from jax import lax
from jax.experimental import pallas as pl
from jax.experimental.pallas import tpu as pltpu


def _round_up(x, m):
    return (x + m - 1) // m * m


def _supcon_tile_kernel(anchor_ref, contrast_ref, out_ref,
                        a_sc, m_sc, l_sc, p_sc, *,
                        n_valid, bsz, n_views, inv_temp, loss_scale,
                        tile_m, tile_n, has_pad, resident):
    i = pl.program_id(0)   # anchor (row) block   -- "parallel"
    j = pl.program_id(1)   # contrast (col) block -- "arbitrary" (reduction)

    @pl.when(j == 0)
    def _init():
        # The scaled/cast anchor strip is constant across j: compute it once
        # per row block (O(tile_m * D)) and cache it in VMEM instead of paying
        # the upcast+mul+downcast on every column block.
        a_sc[...] = (anchor_ref[...].astype(jnp.float32)
                     * inv_temp).astype(jnp.bfloat16)
        m_sc[...] = jnp.full_like(m_sc, -jnp.inf)
        l_sc[...] = jnp.zeros_like(l_sc)
        p_sc[...] = jnp.zeros_like(p_sc)

    # Contrast strip: sliced out of the VMEM-resident copy (fetched from HBM
    # only once for the whole kernel), or the streamed per-tile block.
    if resident:
        col_start = pl.multiple_of(j * tile_n, tile_n)
        b = contrast_ref[pl.ds(col_start, tile_n), :]      # (tile_n, D) bf16
    else:
        b = contrast_ref[...]                              # (tile_n, D) bf16

    # A @ B^T on the MXU, bf16 operands, f32 accumulation.
    # TODO(synk): verify in the bundle dump that this lowers without a vxpose;
    # only pre-transpose contrast in the wrapper if a transpose shows up.
    s = lax.dot_general(a_sc[...], b, (((1,), (1,)), ((), ())),
                        preferred_element_type=jnp.float32)  # (tile_m, tile_n)

    # O(tile)-sized index vectors -> one broadcast compare. The positive-pair
    # mask (same sample, different view) is needed on every tile.
    row = i * tile_m + lax.broadcasted_iota(jnp.int32, (tile_m, 1), 0)
    col = j * tile_n + lax.broadcasted_iota(jnp.int32, (1, tile_n), 1)
    same_sample = (row % bsz) == (col % bsz)

    # Online (flash-style) max / sum-exp. The max is only for numeric
    # stability -- the final expression is shift-invariant -- so taking it over
    # the raw tile (diag / zero-padded columns included) is fine and matches
    # the PyTorch "unmasked row max" quirk by construction.
    m_prev = m_sc[...]
    m_new = jnp.maximum(m_prev, jnp.max(s, axis=1, keepdims=True))
    e = jnp.exp(s - m_new)
    rescale = jnp.exp(m_prev - m_new)

    # Diagonal (self-contrast) exclusion only matters on tiles whose row range
    # overlaps their column range; column padding only exists in the last j
    # block. Interior tiles skip the extra compares/selects entirely.
    row_lo = i * tile_m
    col_lo = j * tile_n
    touches_diag = jnp.logical_and(row_lo < col_lo + tile_n,
                                   col_lo < row_lo + tile_m)
    if has_pad:
        boundary = jnp.logical_or(touches_diag, j == pl.num_programs(1) - 1)
    else:
        boundary = touches_diag

    @pl.when(boundary)
    def _edge_tile():
        col_ok = col < n_valid                  # excludes zero-padded columns
        not_diag = row != col                   # self-contrast exclusion
        include = jnp.logical_and(not_diag, col_ok)
        pos = jnp.logical_and(include, same_sample)
        p_sc[...] += jnp.sum(jnp.where(pos, s, 0.0), axis=1, keepdims=True)
        l_sc[...] = (l_sc[...] * rescale
                     + jnp.sum(jnp.where(include, e, 0.0),
                               axis=1, keepdims=True))

    @pl.when(jnp.logical_not(boundary))
    def _interior_tile():
        # No diagonal and no padding inside this tile: pos == same_sample and
        # the sum-exp needs no masking at all.
        p_sc[...] += jnp.sum(jnp.where(same_sample, s, 0.0),
                             axis=1, keepdims=True)
        l_sc[...] = l_sc[...] * rescale + jnp.sum(e, axis=1, keepdims=True)

    m_sc[...] = m_new

    @pl.when(j == pl.num_programs(1) - 1)
    def _finalize():
        # mean_log_prob_pos = sum(pos*s)/(n_views-1) - logsumexp_masked(s)
        mlpp = (p_sc[...] * (1.0 / (n_views - 1))
                - m_sc[...] - jnp.log(l_sc[...]))
        out_ref[...] = (loss_scale * mlpp).astype(out_ref.dtype)


def supcon_loss(features, temperature=0.07, contrast_mode='all',
                base_temperature=0.07, *, tile_m=512, tile_n=1024,
                resident_byte_limit=8 * 1024 * 1024):
    """features: [bsz, n_views, feat_dim] (or higher-rank trailing dims)."""
    if features.ndim < 3:
        raise ValueError('`features` needs to be [bsz, n_views, ...]')
    if features.ndim > 3:
        features = features.reshape(features.shape[0], features.shape[1], -1)
    if contrast_mode != 'all':
        # TODO(synk): contrast_mode='one' (single-anchor) path not implemented.
        raise ValueError('only contrast_mode="all" is implemented')

    bsz, n_views, d = features.shape
    if n_views < 2:
        # TODO(synk): the PyTorch original silently returns NaN here (0/0).
        raise ValueError('n_views must be >= 2 for the default (SimCLR) path')

    n = bsz * n_views
    # contrast_feature = cat(unbind(features, dim=1), dim=0) -> view-major rows.
    cf = jnp.transpose(features, (1, 0, 2)).reshape(n, d)

    # Tile sizing. Small problems run as one or two tiles (16-row rounding for
    # bf16 sublane packing; two row blocks when cleanly possible so v7x's
    # second TensorCore is not idle). Large problems use 512 x 1024 strips:
    # >= 1-2 us of work per grid step (amortizes the ~0.35 us step overhead)
    # and tile_m large enough to clear the v6e streaming roofline even on the
    # non-resident fallback.
    if n <= tile_m:
        tile_n = _round_up(n, 16)
        tile_m = tile_n // 2 if tile_n % 32 == 0 else tile_n
    if tile_n % tile_m != 0:
        raise ValueError('tile_n must be a multiple of tile_m')
    n_pad = _round_up(n, tile_n)
    if n_pad != n:
        cf = jnp.pad(cf, ((0, n_pad - n), (0, 0)))
    cf_bf16 = cf.astype(jnp.bfloat16)

    # Keep the whole contrast matrix VMEM-resident (fetched from HBM once,
    # reused by every row block) when it fits a conservative budget that still
    # works on v7x (64 MiB physical VMEM) with double-buffering; otherwise
    # stream (tile_n, d) strips per grid step.
    resident = (n_pad * d * 2) <= resident_byte_limit
    if resident:
        contrast_spec = pl.BlockSpec((n_pad, d), lambda i, j: (0, 0))
    else:
        contrast_spec = pl.BlockSpec((tile_n, d), lambda i, j: (j, 0))

    grid = (n_pad // tile_m, n_pad // tile_n)
    kernel = functools.partial(
        _supcon_tile_kernel,
        n_valid=n,
        bsz=bsz,
        n_views=n_views,
        inv_temp=float(1.0 / temperature),
        loss_scale=float(-(temperature / base_temperature)),
        tile_m=tile_m,
        tile_n=tile_n,
        has_pad=(n_pad != n),
        resident=resident,
    )

    per_row = pl.pallas_call(
        kernel,
        out_shape=jax.ShapeDtypeStruct((n_pad, 1), jnp.float32),
        grid_spec=pltpu.PrefetchScalarGridSpec(
            num_scalar_prefetch=0,
            grid=grid,
            in_specs=[
                pl.BlockSpec((tile_m, d), lambda i, j: (i, 0)),  # anchor rows
                contrast_spec,                                   # contrast
            ],
            out_specs=pl.BlockSpec((tile_m, 1), lambda i, j: (i, 0)),
            scratch_shapes=[
                pltpu.VMEM((tile_m, d), jnp.bfloat16),   # scaled anchor cache
                pltpu.VMEM((tile_m, 1), jnp.float32),    # running max
                pltpu.VMEM((tile_m, 1), jnp.float32),    # running sum-exp
                pltpu.VMEM((tile_m, 1), jnp.float32),    # running pos-score sum
            ]),
        compiler_params=pltpu.CompilerParams(
            dimension_semantics=("parallel", "arbitrary"),
            vmem_limit_bytes=48 * 1024 * 1024),
    )(cf_bf16, cf_bf16)

    # loss.view(anchor_count, batch_size).mean() == mean over the N real rows.
    return jnp.mean(per_row[:n, 0])


def _supcon_loss_ref(features, temperature=0.07, base_temperature=0.07,
                     *, mxu_bf16=False):
    """Pure-JAX reference mirroring the PyTorch forward (labels=mask=None).

    mxu_bf16=True mirrors the kernel's bf16 MXU operands (f32 accumulate) so a
    tight tolerance check is possible; mxu_bf16=False is the exact f32 math.
    """
    bsz, n_views, d = features.shape
    n = n_views * bsz
    cf = jnp.transpose(features, (1, 0, 2)).reshape(n, d)
    if mxu_bf16:
        a = (cf.astype(jnp.bfloat16).astype(jnp.float32)
             * (1.0 / temperature)).astype(jnp.bfloat16)
        b = cf.astype(jnp.bfloat16)
        adc = jnp.dot(a, b.T, preferred_element_type=jnp.float32)
    else:
        cf32 = cf.astype(jnp.float32)
        adc = (cf32 @ cf32.T) / temperature
    logits = adc - jnp.max(adc, axis=1, keepdims=True)
    mask = jnp.tile(jnp.eye(bsz, dtype=jnp.float32), (n_views, n_views))
    logits_mask = 1.0 - jnp.eye(n, dtype=jnp.float32)
    mask = mask * logits_mask
    exp_logits = jnp.exp(logits) * logits_mask
    log_prob = logits - jnp.log(jnp.sum(exp_logits, axis=1, keepdims=True))
    mlpp = jnp.sum(mask * log_prob, axis=1) / jnp.sum(mask, axis=1)
    loss = -(temperature / base_temperature) * mlpp
    return jnp.mean(loss)


if __name__ == "__main__":
    key = jax.random.PRNGKey(0)
    k1, k2 = jax.random.split(key)

    # Case 1: tiny single-tile problem (VMEM-resident contrast path).
    bsz, n_views, feat_dim = 8, 2, 32
    feats = jax.random.normal(k1, (bsz, n_views, feat_dim), dtype=jnp.float32)
    feats = feats / jnp.linalg.norm(feats, axis=-1, keepdims=True)

    loss = jax.block_until_ready(supcon_loss(feats))
    ref_bf16 = jax.block_until_ready(_supcon_loss_ref(feats, mxu_bf16=True))
    ref_f32 = jax.block_until_ready(_supcon_loss_ref(feats, mxu_bf16=False))
    # Tight check vs a reference mirroring the kernel's bf16 MXU operands.
    assert jnp.allclose(loss, ref_bf16, rtol=1e-3, atol=1e-3), (loss, ref_bf16)
    # Loose check vs the exact f32 PyTorch math (bf16 operands perturb the
    # Gram matrix at ~1e-3 relative).
    assert jnp.allclose(loss, ref_f32, rtol=5e-2, atol=5e-2), (loss, ref_f32)

    # Case 2: multi-tile grid with column padding. Exercises the boundary /
    # interior mask gating, the online softmax across column blocks, and (via
    # the resident_byte_limit override) the streaming-contrast fallback.
    bsz2, n_views2, feat_dim2 = 90, 2, 64
    feats2 = jax.random.normal(k2, (bsz2, n_views2, feat_dim2), jnp.float32)
    feats2 = feats2 / jnp.linalg.norm(feats2, axis=-1, keepdims=True)
    ref2 = jax.block_until_ready(_supcon_loss_ref(feats2, mxu_bf16=True))
    loss2_res = jax.block_until_ready(
        supcon_loss(feats2, tile_m=32, tile_n=64))                     # resident
    loss2_str = jax.block_until_ready(
        supcon_loss(feats2, tile_m=32, tile_n=64, resident_byte_limit=0))  # streamed
    assert jnp.allclose(loss2_res, ref2, rtol=1e-3, atol=1e-3), (loss2_res, ref2)
    assert jnp.allclose(loss2_str, ref2, rtol=1e-3, atol=1e-3), (loss2_str, ref2)

    print("KERNEL_OK")
</pallas_src>

<mosaic_0001>
module attributes {stable_mosaic.version = 11 : i64} {
  func.func @_supcon_tile_kernel(%arg0: i32, %arg1: i32, %arg2: memref<16x32xbf16, #tpu.memory_space<vmem>>, %arg3: memref<16x32xbf16, #tpu.memory_space<vmem>>, %arg4: memref<16x1xf32, #tpu.memory_space<vmem>>, %arg5: memref<16x32xbf16, #tpu.memory_space<vmem>>, %arg6: memref<16x1xf32, #tpu.memory_space<vmem>>, %arg7: memref<16x1xf32, #tpu.memory_space<vmem>>, %arg8: memref<16x1xf32, #tpu.memory_space<vmem>>) attributes {dimension_semantics = [#tpu.dimension_semantics<parallel>, #tpu.dimension_semantics<arbitrary>], iteration_bounds = array<i64: 1, 1>, scalar_prefetch = 0 : i64, scratch_operands = 4 : i64, tpu.core_type = #tpu.core_type<tc>, window_params = [{transform_indices = @transform_0, window_bounds = array<i64: 16, 32>}, {pipeline_mode = #tpu.pipeline_mode<synchronous>, transform_indices = @transform_1, window_bounds = array<i64: 16, 32>}, {transform_indices = @transform_2, window_bounds = array<i64: 16, 1>}]} {
    %c0_i32 = arith.constant 0 : i32
    %0 = arith.cmpi eq, %arg1, %c0_i32 : i32
    %1 = arith.extui %0 : i1 to i32
    %c0_i32_0 = arith.constant 0 : i32
    %2 = arith.cmpi ne, %1, %c0_i32_0 : i32
    scf.if %2 {
      %c0_28 = arith.constant 0 : index
      %c0_29 = arith.constant 0 : index
      %77 = vector.load %arg2[%c0_28, %c0_29] : memref<16x32xbf16, #tpu.memory_space<vmem>>, vector<16x32xbf16>
      %78 = arith.extf %77 : vector<16x32xbf16> to vector<16x32xf32>
      %cst_30 = arith.constant 14.2857141 : f32
      %79 = vector.broadcast %cst_30 : f32 to vector<16x32xf32>
      %80 = arith.mulf %78, %79 : vector<16x32xf32>
      %81 = arith.truncf %80 : vector<16x32xf32> to vector<16x32xbf16>
      %c0_31 = arith.constant 0 : index
      %c0_32 = arith.constant 0 : index
      %82 = vector.load %arg5[%c0_31, %c0_32] : memref<16x32xbf16, #tpu.memory_space<vmem>>, vector<16x32xbf16>
      tpu.vector_store %arg5[%c0_31, %c0_32], %81 {strides = array<i32>} : memref<16x32xbf16, #tpu.memory_space<vmem>>, vector<16x32xbf16>,
      %cst_33 = arith.constant 0xFF800000 : f32
      %83 = vector.broadcast %cst_33 : f32 to vector<16x1xf32>
      %c0_34 = arith.constant 0 : index
      %c0_35 = arith.constant 0 : index
      %84 = vector.load %arg6[%c0_34, %c0_35] : memref<16x1xf32, #tpu.memory_space<vmem>>, vector<16x1xf32>
      tpu.vector_store %arg6[%c0_34, %c0_35], %83 {strides = array<i32>} : memref<16x1xf32, #tpu.memory_space<vmem>>, vector<16x1xf32>,
      %cst_36 = arith.constant 0.000000e+00 : f32
      %85 = vector.broadcast %cst_36 : f32 to vector<16x1xf32>
      %c0_37 = arith.constant 0 : index
      %c0_38 = arith.constant 0 : index
      %86 = vector.load %arg7[%c0_37, %c0_38] : memref<16x1xf32, #tpu.memory_space<vmem>>, vector<16x1xf32>
      tpu.vector_store %arg7[%c0_37, %c0_38], %85 {strides = array<i32>} : memref<16x1xf32, #tpu.memory_space<vmem>>, vector<16x1xf32>,
      %cst_39 = arith.constant 0.000000e+00 : f32
      %87 = vector.broadcast %cst_39 : f32 to vector<16x1xf32>
      %c0_40 = arith.constant 0 : index
      %c0_41 = arith.constant 0 : index
      %88 = vector.load %arg8[%c0_40, %c0_41] : memref<16x1xf32, #tpu.memory_space<vmem>>, vector<16x1xf32>
      tpu.vector_store %arg8[%c0_40, %c0_41], %87 {strides = array<i32>} : memref<16x1xf32, #tpu.memory_space<vmem>>, vector<16x1xf32>,
    } else {
    }
    %c16_i32 = arith.constant 16 : i32
    %3 = arith.muli %arg1, %c16_i32 : i32
    %4 = tpu.assume_multiple %3, 16 : i32
    %5 = arith.index_cast %4 : i32 to index
    %c0 = arith.constant 0 : index
    %6 = vector.load %arg3[%5, %c0] : memref<16x32xbf16, #tpu.memory_space<vmem>>, vector<16x32xbf16>
    %c0_1 = arith.constant 0 : index
    %c0_2 = arith.constant 0 : index
    %7 = vector.load %arg5[%c0_1, %c0_2] : memref<16x32xbf16, #tpu.memory_space<vmem>>, vector<16x32xbf16>
    %cst = arith.constant dense<0.000000e+00> : vector<16x16xf32>
    %8 = tpu.matmul %7, %6, %cst {dimension_numbers = #tpu.dot_dimension_numbers<[1], [1], [0], [0], [0, 0, 1, 0], [], []>} : vector<16x32xbf16>, vector<16x32xbf16>, vector<16x16xf32> -> vector<16x16xf32>
    %c16_i32_3 = arith.constant 16 : i32
    %9 = arith.muli %arg0, %c16_i32_3 : i32
    %10 = tpu.iota {dimensions = array<i32: 0>} : vector<16x1xi32>
    %11 = vector.broadcast %9 : i32 to vector<16x1xi32>
    %12 = arith.addi %11, %10 : vector<16x1xi32>
    %c16_i32_4 = arith.constant 16 : i32
    %13 = arith.muli %arg1, %c16_i32_4 : i32
    %14 = tpu.iota {dimensions = array<i32: 1>} : vector<1x16xi32>
    %15 = vector.broadcast %13 : i32 to vector<1x16xi32>
    %16 = arith.addi %15, %14 : vector<1x16xi32>
    %c8_i32 = arith.constant 8 : i32
    %c0_i32_5 = arith.constant 0 : i32
    %17 = arith.cmpi eq, %c8_i32, %c0_i32_5 : i32
    %c1_i32 = arith.constant 1 : i32
    %18 = arith.select %17, %c1_i32, %c8_i32 : i32
    %19 = vector.broadcast %18 : i32 to vector<16x1xi32>
    %20 = arith.remsi %12, %19 : vector<16x1xi32>
    %c0_i32_6 = arith.constant 0 : i32
    %21 = vector.broadcast %c0_i32_6 : i32 to vector<16x1xi32>
    %22 = arith.cmpi ne, %20, %21 : vector<16x1xi32>
    %c0_i32_7 = arith.constant 0 : i32
    %23 = vector.broadcast %c0_i32_7 : i32 to vector<16x1xi32>
    %24 = arith.cmpi slt, %20, %23 : vector<16x1xi32>
    %c0_i32_8 = arith.constant 0 : i32
    %25 = arith.cmpi slt, %18, %c0_i32_8 : i32
    %26 = vector.broadcast %25 : i1 to vector<16x1xi1>
    %27 = vector.broadcast %26 : vector<16x1xi1> to vector<16x1xi1>
    %28 = arith.xori %24, %27 : vector<16x1xi1>
    %29 = arith.andi %28, %22 : vector<16x1xi1>
    %30 = vector.broadcast %18 : i32 to vector<16x1xi32>
    %31 = arith.addi %20, %30 : vector<16x1xi32>
    %32 = arith.select %29, %31, %20 : vector<16x1xi1>, vector<16x1xi32>
    %c8_i32_9 = arith.constant 8 : i32
    %c0_i32_10 = arith.constant 0 : i32
    %33 = arith.cmpi eq, %c8_i32_9, %c0_i32_10 : i32
    %c1_i32_11 = arith.constant 1 : i32
    %34 = arith.select %33, %c1_i32_11, %c8_i32_9 : i32
    %35 = vector.broadcast %34 : i32 to vector<1x16xi32>
    %36 = arith.remsi %16, %35 : vector<1x16xi32>
    %c0_i32_12 = arith.constant 0 : i32
    %37 = vector.broadcast %c0_i32_12 : i32 to vector<1x16xi32>
    %38 = arith.cmpi ne, %36, %37 : vector<1x16xi32>
    %c0_i32_13 = arith.constant 0 : i32
    %39 = vector.broadcast %c0_i32_13 : i32 to vector<1x16xi32>
    %40 = arith.cmpi slt, %36, %39 : vector<1x16xi32>
    %c0_i32_14 = arith.constant 0 : i32
    %41 = arith.cmpi slt, %34, %c0_i32_14 : i32
    %42 = vector.broadcast %41 : i1 to vector<1x16xi1>
    %43 = vector.broadcast %42 : vector<1x16xi1> to vector<1x16xi1>
    %44 = arith.xori %40, %43 : vector<1x16xi1>
    %45 = arith.andi %44, %38 : vector<1x16xi1>
    %46 = vector.broadcast %34 : i32 to vector<1x16xi32>
    %47 = arith.addi %36, %46 : vector<1x16xi32>
    %48 = arith.select %45, %47, %36 : vector<1x16xi1>, vector<1x16xi32>
    %49 = vector.broadcast %32 : vector<16x1xi32> to vector<16x16xi32>
    %50 = vector.broadcast %48 : vector<1x16xi32> to vector<16x16xi32>
    %51 = arith.cmpi eq, %49, %50 : vector<16x16xi32>
    %c0_15 = arith.constant 0 : index
    %c0_16 = arith.constant 0 : index
    %52 = vector.load %arg6[%c0_15, %c0_16] : memref<16x1xf32, #tpu.memory_space<vmem>>, vector<16x1xf32>
    %cst_17 = arith.constant dense<0xFF800000> : vector<16xf32>
    %53 = vector.multi_reduction <maximumf>, %8, %cst_17 [1] : vector<16x16xf32> to vector<16xf32>
    %54 = vector.shape_cast %53 : vector<16xf32> to vector<16x1xf32>
    %55 = arith.maximumf %52, %54 : vector<16x1xf32>
    %56 = vector.broadcast %55 : vector<16x1xf32> to vector<16x16xf32>
    %57 = arith.subf %8, %56 : vector<16x16xf32>
    %58 = math.exp %57 : vector<16x16xf32>
    %59 = arith.subf %52, %55 : vector<16x1xf32>
    %60 = math.exp %59 : vector<16x1xf32>
    %c16_i32_18 = arith.constant 16 : i32
    %61 = arith.muli %arg0, %c16_i32_18 : i32
    %c16_i32_19 = arith.constant 16 : i32
    %62 = arith.muli %arg1, %c16_i32_19 : i32
    %c16_i32_20 = arith.constant 16 : i32
    %63 = arith.addi %62, %c16_i32_20 : i32
    %64 = arith.cmpi slt, %61, %63 : i32
    %c16_i32_21 = arith.constant 16 : i32
    %65 = arith.addi %61, %c16_i32_21 : i32
    %66 = arith.cmpi slt, %62, %65 : i32
    %67 = arith.andi %64, %66 : i1
    %68 = arith.extui %67 : i1 to i32
    %c0_i32_22 = arith.constant 0 : i32
    %69 = arith.cmpi ne, %68, %c0_i32_22 : i32
    scf.if %69 {
      %c16_i32_28 = arith.constant 16 : i32
      %77 = vector.broadcast %c16_i32_28 : i32 to vector<1x16xi32>
      %78 = arith.cmpi slt, %16, %77 : vector<1x16xi32>
      %79 = vector.broadcast %12 : vector<16x1xi32> to vector<16x16xi32>
      %80 = vector.broadcast %16 : vector<1x16xi32> to vector<16x16xi32>
      %81 = arith.cmpi ne, %79, %80 : vector<16x16xi32>
      %82 = vector.broadcast %78 : vector<1x16xi1> to vector<16x16xi1>
      %83 = arith.andi %81, %82 : vector<16x16xi1>
      %84 = arith.andi %83, %51 : vector<16x16xi1>
      %c0_29 = arith.constant 0 : index
      %c0_30 = arith.constant 0 : index
      %85 = vector.load %arg8[%c0_29, %c0_30] : memref<16x1xf32, #tpu.memory_space<vmem>>, vector<16x1xf32>
      %cst_31 = arith.constant 0.000000e+00 : f32
      %86 = vector.broadcast %cst_31 : f32 to vector<16x16xf32>
      %87 = arith.select %84, %8, %86 : vector<16x16xi1>, vector<16x16xf32>
      %cst_32 = arith.constant dense<0.000000e+00> : vector<16xf32>
      %88 = vector.multi_reduction <add>, %87, %cst_32 [1] : vector<16x16xf32> to vector<16xf32>
      %89 = vector.shape_cast %88 : vector<16xf32> to vector<16x1xf32>
      %90 = arith.addf %85, %89 : vector<16x1xf32>
      %c0_33 = arith.constant 0 : index
      %c0_34 = arith.constant 0 : index
      %91 = vector.load %arg8[%c0_33, %c0_34] : memref<16x1xf32, #tpu.memory_space<vmem>>, vector<16x1xf32>
      tpu.vector_store %arg8[%c0_33, %c0_34], %90 {strides = array<i32>} : memref<16x1xf32, #tpu.memory_space<vmem>>, vector<16x1xf32>,
      %c0_35 = arith.constant 0 : index
      %c0_36 = arith.constant 0 : index
      %92 = vector.load %arg7[%c0_35, %c0_36] : memref<16x1xf32, #tpu.memory_space<vmem>>, vector<16x1xf32>
      %93 = arith.mulf %92, %60 : vector<16x1xf32>
      %cst_37 = arith.constant 0.000000e+00 : f32
      %94 = vector.broadcast %cst_37 : f32 to vector<16x16xf32>
      %95 = arith.select %83, %58, %94 : vector<16x16xi1>, vector<16x16xf32>
      %cst_38 = arith.constant dense<0.000000e+00> : vector<16xf32>
      %96 = vector.multi_reduction <add>, %95, %cst_38 [1] : vector<16x16xf32> to vector<16xf32>
      %97 = vector.shape_cast %96 : vector<16xf32> to vector<16x1xf32>
      %98 = arith.addf %93, %97 : vector<16x1xf32>
      %c0_39 = arith.constant 0 : index
      %c0_40 = arith.constant 0 : index
      %99 = vector.load %arg7[%c0_39, %c0_40] : memref<16x1xf32, #tpu.memory_space<vmem>>, vector<16x1xf32>
      tpu.vector_store %arg7[%c0_39, %c0_40], %98 {strides = array<i32>} : memref<16x1xf32, #tpu.memory_space<vmem>>, vector<16x1xf32>,
    } else {
    }
    %true = arith.constant true
    %70 = arith.xori %67, %true : i1
    %71 = arith.extui %70 : i1 to i32
    %c0_i32_23 = arith.constant 0 : i32
    %72 = arith.cmpi ne, %71, %c0_i32_23 : i32
    scf.if %72 {
      %c0_28 = arith.constant 0 : index
      %c0_29 = arith.constant 0 : index
      %77 = vector.load %arg8[%c0_28, %c0_29] : memref<16x1xf32, #tpu.memory_space<vmem>>, vector<16x1xf32>
      %cst_30 = arith.constant 0.000000e+00 : f32
      %78 = vector.broadcast %cst_30 : f32 to vector<16x16xf32>
      %79 = arith.select %51, %8, %78 : vector<16x16xi1>, vector<16x16xf32>
      %cst_31 = arith.constant dense<0.000000e+00> : vector<16xf32>
      %80 = vector.multi_reduction <add>, %79, %cst_31 [1] : vector<16x16xf32> to vector<16xf32>
      %81 = vector.shape_cast %80 : vector<16xf32> to vector<16x1xf32>
      %82 = arith.addf %77, %81 : vector<16x1xf32>
      %c0_32 = arith.constant 0 : index
      %c0_33 = arith.constant 0 : index
      %83 = vector.load %arg8[%c0_32, %c0_33] : memref<16x1xf32, #tpu.memory_space<vmem>>, vector<16x1xf32>
      tpu.vector_store %arg8[%c0_32, %c0_33], %82 {strides = array<i32>} : memref<16x1xf32, #tpu.memory_space<vmem>>, vector<16x1xf32>,
      %c0_34 = arith.constant 0 : index
      %c0_35 = arith.constant 0 : index
      %84 = vector.load %arg7[%c0_34, %c0_35] : memref<16x1xf32, #tpu.memory_space<vmem>>, vector<16x1xf32>
      %85 = arith.mulf %84, %60 : vector<16x1xf32>
      %cst_36 = arith.constant dense<0.000000e+00> : vector<16xf32>
      %86 = vector.multi_reduction <add>, %58, %cst_36 [1] : vector<16x16xf32> to vector<16xf32>
      %87 = vector.shape_cast %86 : vector<16xf32> to vector<16x1xf32>
      %88 = arith.addf %85, %87 : vector<16x1xf32>
      %c0_37 = arith.constant 0 : index
      %c0_38 = arith.constant 0 : index
      %89 = vector.load %arg7[%c0_37, %c0_38] : memref<16x1xf32, #tpu.memory_space<vmem>>, vector<16x1xf32>
      tpu.vector_store %arg7[%c0_37, %c0_38], %88 {strides = array<i32>} : memref<16x1xf32, #tpu.memory_space<vmem>>, vector<16x1xf32>,
    } else {
    }
    %c0_24 = arith.constant 0 : index
    %c0_25 = arith.constant 0 : index
    %73 = vector.load %arg6[%c0_24, %c0_25] : memref<16x1xf32, #tpu.memory_space<vmem>>, vector<16x1xf32>
    tpu.vector_store %arg6[%c0_24, %c0_25], %55 {strides = array<i32>} : memref<16x1xf32, #tpu.memory_space<vmem>>, vector<16x1xf32>,
    %c0_i32_26 = arith.constant 0 : i32
    %74 = arith.cmpi eq, %arg1, %c0_i32_26 : i32
    %75 = arith.extui %74 : i1 to i32
    %c0_i32_27 = arith.constant 0 : i32
    %76 = arith.cmpi ne, %75, %c0_i32_27 : i32
    scf.if %76 {
      %c0_28 = arith.constant 0 : index
      %c0_29 = arith.constant 0 : index
      %77 = vector.load %arg8[%c0_28, %c0_29] : memref<16x1xf32, #tpu.memory_space<vmem>>, vector<16x1xf32>
      %cst_30 = arith.constant 1.000000e+00 : f32
      %78 = vector.broadcast %cst_30 : f32 to vector<16x1xf32>
      %79 = arith.mulf %77, %78 : vector<16x1xf32>
      %c0_31 = arith.constant 0 : index
      %c0_32 = arith.constant 0 : index
      %80 = vector.load %arg6[%c0_31, %c0_32] : memref<16x1xf32, #tpu.memory_space<vmem>>, vector<16x1xf32>
      %81 = arith.subf %79, %80 : vector<16x1xf32>
      %c0_33 = arith.constant 0 : index
      %c0_34 = arith.constant 0 : index
      %82 = vector.load %arg7[%c0_33, %c0_34] : memref<16x1xf32, #tpu.memory_space<vmem>>, vector<16x1xf32>
      %83 = math.log %82 : vector<16x1xf32>
      %84 = arith.subf %81, %83 : vector<16x1xf32>
      %cst_35 = arith.constant -1.000000e+00 : f32
      %85 = vector.broadcast %cst_35 : f32 to vector<16x1xf32>
      %86 = arith.mulf %85, %84 : vector<16x1xf32>
      %c0_36 = arith.constant 0 : index
      %c0_37 = arith.constant 0 : index
      %87 = vector.load %arg4[%c0_36, %c0_37] : memref<16x1xf32, #tpu.memory_space<vmem>>, vector<16x1xf32>
      tpu.vector_store %arg4[%c0_36, %c0_37], %86 {strides = array<i32>} : memref<16x1xf32, #tpu.memory_space<vmem>>, vector<16x1xf32>,
    } else {
    }
    return
  }
  func.func @transform_0(%arg0: i32, %arg1: i32) -> (i32, i32) {
    %c0_i32 = arith.constant 0 : i32
    %c0_i32_0 = arith.constant 0 : i32
    return %arg0, %c0_i32 : i32, i32
  }
  func.func @transform_1(%arg0: i32, %arg1: i32) -> (i32, i32) {
    %c0_i32 = arith.constant 0 : i32
    %c0_i32_0 = arith.constant 0 : i32
    %c0_i32_1 = arith.constant 0 : i32
    return %c0_i32, %c0_i32_0 : i32, i32
  }
  func.func @transform_2(%arg0: i32, %arg1: i32) -> (i32, i32) {
    %c0_i32 = arith.constant 0 : i32
    %c0_i32_0 = arith.constant 0 : i32
    return %arg0, %c0_i32 : i32, i32
  }
}

</mosaic_0001>

<llo_original>
// kernel: tpu_custom_call.1
$region0: #{tpu_custom_call.1}
  #allocation0 [shape = 'u32[]', space=smem, size = 0x4, offset = 0x4, fixed_abs, tag = 'smem constant byte address 0x4 - core index']
  #allocation1 [shape = 'u32[144,128]{1,0:T(1,128)}', space=vmem, size = 0x12000, scoped, tag = 'internal scratch']
  #allocation2 [shape = 'bf16[16,32]{1,0:T(16,128)(2,1)}', space=vmem, size = 0x1000, scoped, tag = 'scratch operand']
  #allocation3 [shape = 'f32[16,1]{1,0:T(8,128)}', space=vmem, size = 0x2000, scoped, tag = 'scratch operand']
  #allocation4 [shape = 'f32[16,1]{1,0:T(8,128)}', space=vmem, size = 0x2000, scoped, tag = 'scratch operand']
  #allocation5 [shape = 'f32[16,1]{1,0:T(8,128)}', space=vmem, size = 0x2000, scoped, tag = 'scratch operand']
  %s0 = inlined_call_operand.hbm [shape: bf16[16,32], index: 0, kind: input, shape index: {}]
  %s1 = inlined_call_operand.hbm [shape: bf16[16,32], index: 1, kind: input, shape index: {}]
  %s2 = inlined_call_operand.vmem [shape: f32[16,1], index: 2, kind: output, shape index: {}]
  %s3 = sld [smem:[#allocation0]]
  $region42: #{tpu_custom_call.1} parent=0
    _
  %s5 = ssub.s32 1, %s3
  %s6 = scalar_select 0, %s5, %s3
  $region1: #{tpu_custom_call.1} parent=0
    #allocation6 [shape = 'u8[4096]{0}', space=vmem, size = 0x1000, scoped, tag = 'input window, operand 0, single buffered']
    #allocation7 [shape = 's32[1]{0}', space=sflag, size = 0x4, scoped, tag = 'scoped memory for tpu_custom_call.1']
    #allocation8 [shape = 'u8[4096]{0}', space=vmem, size = 0x1000, scoped, tag = 'input window, operand 1, single buffered']
    #allocation9 [shape = 's32[1]{0}', space=sflag, size = 0x4, scoped, tag = 'scoped memory for tpu_custom_call.1']
    %7 = vsyncpa [#allocation7], 0
    %8 = vsyncpa [#allocation9], 0
    // Predicated region
    $region2: #{tpu_custom_call.1} parent=1 // pred_check
      _
    $region3: #{tpu_custom_call.1} parent=1 // pred_check_branch
      %10 = sbr.rel (0) target = $region5
    $region4: #{tpu_custom_call.1} parent=1 // pred_region
      %s12 = ssub.s32 128, 128
      %13 = vsyncadd [#allocation7], %s12
      %s14 = sshll.u32 [#allocation6], 4
      %s15 = int_to_ptr.vmem [resolvable:$true] %s14
      %20 = dma.hbm_to_vmem [thread:$0]  %s0, 128, %s15, [#allocation7], 64, 64, 4
    $region5: #{tpu_custom_call.1} parent=1 // pred_fallthru
      _
    // Predicated region
    $region6: #{tpu_custom_call.1} parent=1 // pred_check
      _
    $region7: #{tpu_custom_call.1} parent=1 // pred_check_branch
      %22 = sbr.rel (0) target = $region9
    $region8: #{tpu_custom_call.1} parent=1 // pred_region
      %s24 = ssub.s32 128, 128
      %25 = vsyncadd [#allocation9], %s24
      %s26 = sshll.u32 [#allocation8], 4
      %s27 = int_to_ptr.vmem [resolvable:$true] %s26
      %32 = dma.hbm_to_vmem [thread:$0]  %s1, 128, %s27, [#allocation9], 64, 64, 4
    $region9: #{tpu_custom_call.1} parent=1 // pred_fallthru
      _
    // Predicated region
    $region10: #{tpu_custom_call.1} parent=1 // pred_check
      _
    $region11: #{tpu_custom_call.1} parent=1 // pred_check_branch
      %34 = sbr.rel (0) target = $region13
    $region12: #{tpu_custom_call.1} parent=1 // pred_region
      %35 = dma.done [#allocation7], 128
    $region13: #{tpu_custom_call.1} parent=1 // pred_fallthru
      _
    // Predicated region
    $region14: #{tpu_custom_call.1} parent=1 // pred_check
      _
    $region15: #{tpu_custom_call.1} parent=1 // pred_check_branch
      %37 = sbr.rel (0) target = $region17
    $region16: #{tpu_custom_call.1} parent=1 // pred_region
      %38 = dma.done [#allocation9], 128
    $region17: #{tpu_custom_call.1} parent=1 // pred_fallthru
      _
    %p40 = scmp.eq.s32.totalorder 0, 0
    // Predicated region
    $region18: #{tpu_custom_call.1} parent=1 // pred_check
      %p41 = pneg %p40
    $region19: #{tpu_custom_call.1} parent=1 // pred_check_branch
      %43 = sbr.rel (%p41) target = $region21
    $region20: #{tpu_custom_call.1} parent=1 // pred_region
      %v44 = vld [vmem:[#allocation6] sm:$0xf]
      %v45 = vld [vmem:[#allocation6 + $0x4] sm:$0xf]
      %v46 = vunpack.c.l.bf16 %v44
      %v47 = vunpack.c.l.bf16 %v45
      %v48 = vmul.f32 %v46, 14.285714
      %v49 = vmul.f32 %v47, 14.285714
      %v50 = vpack.c.bf16 %v49, %v48
      %vm51 = vcmask 261120
      %52 = vst.msk [vmem:[#allocation2] sm:$0xff] %vm51, %v50
      %vm53 = vcmask 7168
      %54 = vst.msk [vmem:[#allocation3] sm:$0xff] %vm53, -inf
      %55 = vst.msk [vmem:[#allocation3 + $0x8] sm:$0xff] %vm53, -inf
      %56 = vst.msk [vmem:[#allocation4] sm:$0xff] %vm53, 0.0
      %57 = vst.msk [vmem:[#allocation4 + $0x8] sm:$0xff] %vm53, 0.0
      %58 = vst.msk [vmem:[#allocation5] sm:$0xff] %vm53, 0.0
      %59 = vst.msk [vmem:[#allocation5 + $0x8] sm:$0xff] %vm53, 0.0
    $region21: #{tpu_custom_call.1} parent=1 // pred_fallthru
      _
    %s60 = smul.u32 0, 16
    %s61 = sshra.s32 %s60, 3
    %s62 = sand.u32 %s60, 7
    %s63 = smul.addr %s61, 4
    %s64 = scalar_lea.vmem [#allocation8], %s63
    %v65 = vld [vmem:[%s64] sm:$0xf]
    %v66 = vld [vmem:[%s64 + $0x4] sm:$0xf]
    %v67 = vld [vmem:[#allocation2] sm:$0xff]
    %v70 = vunpack.c.l.b16 %v65
    %v71 = vunpack.c.l.b16 %v66
    %v72 = vpack.c.b16 %v71, %v70
    %vm73 = vcmask 261120
    %v75 = vsel %vm73, %v67, 0
    %v78 = vsel %vm73, %v72, 0
    %80 = vmatprep.subr.bf16.mxu0 0
    %81 = vmatpush1.bf16.xpose.msra.mxu0 %v78
    %82 = vmatprep.subr.bf16.mxu0 0
    %83 = vmatpush1.bf16.xpose.msra.mxu0 0
    %84 = vmatprep.subr.bf16.mxu0 0
    %85 = vmatpush1.bf16.xpose.msra.mxu0 0
    %86 = vmatprep.subr.bf16.mxu0 0
    %87 = vmatpush1.bf16.xpose.msra.mxu0 0
    %88 = vmatprep.subr.bf16.mxu0 0
    %89 = vmatpush1.bf16.xpose.msra.mxu0 0
    %90 = vmatprep.subr.bf16.mxu0 0
    %91 = vmatpush1.bf16.xpose.msra.mxu0 0
    %92 = vmatprep.subr.bf16.mxu0 0
    %93 = vmatpush1.bf16.xpose.msra.mxu0 0
    %94 = vmatprep.subr.bf16.mxu0 0
    %95 = vmatpush1.bf16.xpose.msra.mxu0 0
    %96 = vmatprep.subr.bf16.mxu0 0
    %97 = vmatpush1.bf16.xpose.msra.mxu0 0
    %98 = vmatprep.subr.bf16.mxu0 0
    %99 = vmatpush1.bf16.xpose.msra.mxu0 0
    %100 = vmatprep.subr.bf16.mxu0 0
    %101 = vmatpush1.bf16.xpose.msra.mxu0 0
    %102 = vmatprep.subr.bf16.mxu0 0
    %103 = vmatpush1.bf16.xpose.msra.mxu0 0
    %104 = vmatprep.subr.bf16.mxu0 0
    %105 = vmatpush1.bf16.xpose.msra.mxu0 0
    %106 = vmatprep.subr.bf16.mxu0 0
    %107 = vmatpush1.bf16.xpose.msra.mxu0 0
    %108 = vmatprep.subr.bf16.mxu0 0
    %109 = vmatpush1.bf16.xpose.msra.mxu0 0
    %110 = vmatprep.subr.bf16.mxu0 0
    %111 = vmatpush1.bf16.xpose.msra.mxu0 0
    %112 = vmatprep.mubr.bf16.mxu0 0
    %113 = vmatmul.mubr.bf16.gmra.mrb[0].mxu0 %v75
    %v114 = vpop.f32.mrb[0].mxu0
    %v115 = vadd.f32 0.0, %v114
    %v116 = vpop.f32.mrb[0].mxu0
    %v117 = vpop.f32.mrb[0].mxu0
    %v118 = vadd.f32 0.0, %v117
    %v119 = vpop.f32.mrb[0].mxu0
    %120 = vdwg.mxu0
    %s121 = smul.u32 0, 16
    %v122 = vlaneseq
    %v123 = vshrl.u32 %v122, 7
    %v124 = vadd.s32 %v123, 8
    %v125 = vstv %s121
    %v126 = vadd.s32 %v125, %v123
    %v127 = vadd.s32 %v125, %v124
    %v128 = vlaneseq
    %v129 = vand.u32 %v128, 127
    %v130 = vstv %s60
    %v131 = vadd.s32 %v130, %v129
    %vm132 = vcmp.lt.s32.totalorder %v126, 0
    %v133 = vsub.s32 0, %v126
    %v134 = vsel %vm132, %v133, %v126
    %v135 = vshrl.u32 %v134, 3
    %v136 = vand.u32 %v134, 7
    %v137 = vsub.s32 0, %v136
    %v138 = vsel %vm132, %v137, %v136
    %vm139 = vcmp.lt.s32.totalorder %v127, 0
    %v140 = vsub.s32 0, %v127
    %v141 = vsel %vm139, %v140, %v127
    %v142 = vshrl.u32 %v141, 3
    %v143 = vand.u32 %v141, 7
    %v144 = vsub.s32 0, %v143
    %v145 = vsel %vm139, %v144, %v143
    %vm146 = vcmp.ne.s32.totalorder %v138, 0
    %vm147 = vcmp.ne.s32.totalorder %v145, 0
    %vm148 = vcmp.lt.s32.totalorder %v138, 0
    %vm149 = vcmp.lt.s32.totalorder %v145, 0
    %vm150 = vmand %vm148, %vm146
    %vm151 = vmand %vm149, %vm147
    %v152 = vadd.s32 %v138, 8
    %v153 = vadd.s32 %v145, 8
    %v154 = vsel %vm150, %v152, %v138
    %v155 = vsel %vm151, %v153, %v145
    %vm156 = vcmp.lt.s32.totalorder %v131, 0
    %v157 = vsub.s32 0, %v131
    %v158 = vsel %vm156, %v157, %v131
    %v159 = vshrl.u32 %v158, 3
    %v160 = vand.u32 %v158, 7
    %v161 = vsub.s32 0, %v160
    %v162 = vsel %vm156, %v161, %v160
    %vm163 = vcmp.ne.s32.totalorder %v162, 0
    %vm164 = vcmp.lt.s32.totalorder %v162, 0
    %vm165 = vmand %vm164, %vm163
    %v166 = vadd.s32 %v162, 8
    %v167 = vsel %vm165, %v166, %v162
    %vm168 = vcmp.eq.s32.totalorder %v154, %v167
    %vm169 = vcmp.eq.s32.totalorder %v155, %v167
    %v170 = vld [vmem:[#allocation3] sm:$0xff]
    %v171 = vld [vmem:[#allocation3 + $0x8] sm:$0xff]
    %vm172 = vcmask 130048
    %v173 = vsel %vm172, %v115, -inf
    %174 = vmax.xlane.f32.xlu0 %v173
    %v175 = vpop.xlane.xlu0 %174
    %v176 = vsel %vm172, %v118, -inf
    %177 = vmax.xlane.f32.xlu0 %v176
    %v178 = vpop.xlane.xlu0 %177
    %v179 = vmax.f32 %v170, %v175
    %v180 = vmax.f32 %v171, %v178
    %182 = vset.pattern.permute.xlu0 0
    %183 = vperm.xlu0 %182, %v179
    %v184 = vpop.permute.xlu0 %183
    %187 = vset.pattern.permute.xlu0 0
    %188 = vperm.xlu0 %187, %v180
    %v189 = vpop.permute.xlu0 %188
    %v191 = vsub.f32 %v115, %v184
    %v192 = vsub.f32 %v118, %v189
    %v193 = vmul.f32 %v191, 1.442695
    %v194 = vpow.pop %v193
    %v195 = vmul.f32 %v192, 1.442695
    %v196 = vpow.pop %v195
    %v197 = vsub.f32 %v170, %v179
    %v198 = vsub.f32 %v171, %v180
    %v199 = vmul.f32 %v197, 1.442695
    %v200 = vpow.pop %v199
    %v201 = vmul.f32 %v198, 1.442695
    %v202 = vpow.pop %v201
    %s203 = sadd.s32 %s60, 16
    %p204 = scmp.lt.s32.totalorder %s121, %s203
    %s205 = sadd.s32 %s121, 16
    %p206 = scmp.lt.s32.totalorder %s60, %s205
    %p207 = pnand %p204, %p206
    %p208 = pneg %p207
    // Predicated region
    $region22: #{tpu_custom_call.1} parent=1 // pred_check
      _
    $region23: #{tpu_custom_call.1} parent=1 // pred_check_branch
      %210 = sbr.rel (%p207) target = $region25
    $region24: #{tpu_custom_call.1} parent=1 // pred_region
      %vm211 = vcmp.lt.s32.totalorder %v131, 16
      %vm212 = vcmp.ne.s32.totalorder %v126, %v131
      %vm213 = vcmp.ne.s32.totalorder %v127, %v131
      %v214 = vsel %vm211, 1, 0
      %vm215 = vcmp.eq.s32.totalorder %v214, 1
      %vm216 = vmand %vm212, %vm215
      %vm217 = vmand %vm213, %vm215
      %vm218 = vmand %vm216, %vm168
      %vm219 = vmand %vm217, %vm169
      %v220 = vld [vmem:[#allocation5] sm:$0xff]
      %v221 = vld [vmem:[#allocation5 + $0x8] sm:$0xff]
      %v222 = vsel %vm218, %v115, 0.0
      %v223 = vsel %vm219, %v118, 0.0
      %v224 = vsel %vm172, %v222, 0.0
      %225 = vadd.xlane.f32.xlu0 %v224
      %v226 = vpop.xlane.xlu0 %225
      %v227 = vsel %vm172, %v223, 0.0
      %228 = vadd.xlane.f32.xlu0 %v227
      %v229 = vpop.xlane.xlu0 %228
      %v230 = vadd.f32 %v220, %v226
      %v231 = vadd.f32 %v221, %v229
      %vm232 = vcmask 7168
      %233 = vst.msk [vmem:[#allocation5] sm:$0xff] %vm232, %v230
      %234 = vst.msk [vmem:[#allocation5 + $0x8] sm:$0xff] %vm232, %v231
      %v235 = vld [vmem:[#allocation4] sm:$0xff]
      %v236 = vld [vmem:[#allocation4 + $0x8] sm:$0xff]
      %v237 = vmul.f32 %v235, %v200
      %v238 = vmul.f32 %v236, %v202
      %v239 = vsel %vm216, %v194, 0.0
      %v240 = vsel %vm217, %v196, 0.0
      %v241 = vsel %vm172, %v239, 0.0
      %242 = vadd.xlane.f32.xlu0 %v241
      %v243 = vpop.xlane.xlu0 %242
      %v244 = vsel %vm172, %v240, 0.0
      %245 = vadd.xlane.f32.xlu0 %v244
      %v246 = vpop.xlane.xlu0 %245
      %v247 = vadd.f32 %v237, %v243
      %v248 = vadd.f32 %v238, %v246
      %249 = vst.msk [vmem:[#allocation4] sm:$0xff] %vm232, %v247
      %250 = vst.msk [vmem:[#allocation4 + $0x8] sm:$0xff] %vm232, %v248
    $region25: #{tpu_custom_call.1} parent=1 // pred_fallthru
      _
    %p251 = pneg %p208
    // Predicated region
    $region26: #{tpu_custom_call.1} parent=1 // pred_check
      _
    $region27: #{tpu_custom_call.1} parent=1 // pred_check_branch
      %253 = sbr.rel (%p208) target = $region29
    $region28: #{tpu_custom_call.1} parent=1 // pred_region
      %v254 = vld [vmem:[#allocation5] sm:$0xff]
      %v255 = vld [vmem:[#allocation5 + $0x8] sm:$0xff]
      %v256 = vsel %vm168, %v115, 0.0
      %v257 = vsel %vm169, %v118, 0.0
      %v258 = vsel %vm172, %v256, 0.0
      %259 = vadd.xlane.f32.xlu0 %v258
      %v260 = vpop.xlane.xlu0 %259
      %v261 = vsel %vm172, %v257, 0.0
      %262 = vadd.xlane.f32.xlu0 %v261
      %v263 = vpop.xlane.xlu0 %262
      %v264 = vadd.f32 %v254, %v260
      %v265 = vadd.f32 %v255, %v263
      %vm266 = vcmask 7168
      %267 = vst.msk [vmem:[#allocation5] sm:$0xff] %vm266, %v264
      %268 = vst.msk [vmem:[#allocation5 + $0x8] sm:$0xff] %vm266, %v265
      %v269 = vld [vmem:[#allocation4] sm:$0xff]
      %v270 = vld [vmem:[#allocation4 + $0x8] sm:$0xff]
      %v271 = vmul.f32 %v269, %v200
      %v272 = vmul.f32 %v270, %v202
      %v273 = vsel %vm172, %v194, 0.0
      %274 = vadd.xlane.f32.xlu0 %v273
      %v275 = vpop.xlane.xlu0 %274
      %v276 = vsel %vm172, %v196, 0.0
      %277 = vadd.xlane.f32.xlu0 %v276
      %v278 = vpop.xlane.xlu0 %277
      %v279 = vadd.f32 %v271, %v275
      %v280 = vadd.f32 %v272, %v278
      %281 = vst.msk [vmem:[#allocation4] sm:$0xff] %vm266, %v279
      %282 = vst.msk [vmem:[#allocation4 + $0x8] sm:$0xff] %vm266, %v280
    $region29: #{tpu_custom_call.1} parent=1 // pred_fallthru
      _
    %vm283 = vcmask 7168
    %284 = vst.msk [vmem:[#allocation3] sm:$0xff] %vm283, %v179
    %285 = vst.msk [vmem:[#allocation3 + $0x8] sm:$0xff] %vm283, %v180
    // Predicated region
    $region30: #{tpu_custom_call.1} parent=1 // pred_check
      %p286 = pneg %p40
    $region31: #{tpu_custom_call.1} parent=1 // pred_check_branch
      %288 = sbr.rel (%p286) target = $region33
    $region32: #{tpu_custom_call.1} parent=1 // pred_region
      %v289 = vld [vmem:[#allocation5] sm:$0xff]
      %v290 = vld [vmem:[#allocation5 + $0x8] sm:$0xff]
      %v291 = vld [vmem:[#allocation3] sm:$0xff]
      %v292 = vld [vmem:[#allocation3 + $0x8] sm:$0xff]
      %v293 = vsub.f32 %v289, %v291
      %v294 = vsub.f32 %v290, %v292
      %v295 = vld [vmem:[#allocation4] sm:$0xff]
      %v296 = vld [vmem:[#allocation4 + $0x8] sm:$0xff]
      %v297 = vlog2.pop %v295
      %v298 = vmul.f32 %v297, 0.6931472
      %v299 = vlog2.pop %v296
      %v300 = vmul.f32 %v299, 0.6931472
      %v301 = vsub.f32 %v293, %v298
      %v302 = vsub.f32 %v294, %v300
      %v303 = vmul.f32 %v301, -1.0
      %v304 = vmul.f32 %v302, -1.0
      %305 = vst.msk [vmem:[%s2] sm:$0xff] %vm283, %v303
      %306 = vst.msk [vmem:[%s2 + $0x8] sm:$0xff] %vm283, %v304
    $region33: #{tpu_custom_call.1} parent=1 // pred_fallthru
      _
    // Predicated region
    $region34: #{tpu_custom_call.1} parent=1 // pred_check
      _
    $region35: #{tpu_custom_call.1} parent=1 // pred_check_branch
      %308 = sbr.rel (0) target = $region37
    $region36: #{tpu_custom_call.1} parent=1 // pred_region
      _
    $region37: #{tpu_custom_call.1} parent=1 // pred_fallthru
      _
    // Predicated region
    $region38: #{tpu_custom_call.1} parent=1 // pred_check
      _
    $region39: #{tpu_custom_call.1} parent=1 // pred_check_branch
      %310 = sbr.rel (0) target = $region41
    $region40: #{tpu_custom_call.1} parent=1 // pred_region
      _
    $region41: #{tpu_custom_call.1} parent=1 // pred_fallthru
      _
    %311 = vsyncpa [#allocation7], 1
    %312 = vsyncpa [#allocation9], 1

</llo_original>
